<compile_context>
chip_gen: v7x
topology: tpu7x:2x2x1
jax: 0.10.0
libtpu: 0.0.40
codegen_flags: <defaults>
</compile_context>

<pallas_src>
import jax
import jax.numpy as jnp
from jax import lax
from jax.experimental import pallas as pl
from jax.experimental.pallas import tpu as pltpu

LANE = 128
SUBLANE = 8
# 2048 x 128 f32 tile = 1 MiB; 2 inputs x 2 pipeline buffers = 4 MiB VMEM.
MAX_TILE_ROWS = 2048


def _round_up(x, m):
    return ((x + m - 1) // m) * m


def _make_mse_sum_kernel(n_true, tile_rows, steps_per_split):
    """Kernel accumulating sum((x - t)^2) into an (8, 128) vector accumulator."""
    blk_elems = tile_rows * LANE

    def kernel(x_ref, t_ref, out_ref, acc_ref):
        c = pl.program_id(0)  # "parallel" split (sharded across TCs on v7x)
        i = pl.program_id(1)  # sequential reduction steps within the split

        @pl.when(i == 0)
        def _():
            acc_ref[...] = jnp.zeros_like(acc_ref)

        # Cast in-kernel (keeps bf16 inputs narrow in HBM).
        d = x_ref[...].astype(jnp.float32) - t_ref[...].astype(jnp.float32)
        sq = d * d

        step = c * steps_per_split + i
        block_start = step * blk_elems
        is_full = (block_start + blk_elems) <= n_true

        # Fast path: whole block valid -> pure elementwise (VALU) accumulation,
        # hidden under the HBM stream.
        @pl.when(is_full)
        def _():
            acc_ref[...] += jnp.sum(
                sq.reshape(tile_rows // SUBLANE, SUBLANE, LANE), axis=0)

        # Tail path: mask out elements past the true element count (also covers
        # fully padded grid steps and unspecified reads of partial blocks).
        @pl.when(jnp.logical_not(is_full))
        def _():
            r = lax.broadcasted_iota(jnp.int32, (tile_rows, LANE), 0)
            col = lax.broadcasted_iota(jnp.int32, (tile_rows, LANE), 1)
            gidx = block_start + r * LANE + col
            msq = jnp.where(gidx < n_true, sq, 0.0)
            acc_ref[...] += jnp.sum(
                msq.reshape(tile_rows // SUBLANE, SUBLANE, LANE), axis=0)

        # Finalize: write this split's vector partial sum (no in-kernel lane reduce).
        @pl.when(i == steps_per_split - 1)
        def _():
            out_ref[...] = acc_ref[...]

    return kernel


def _mse_loss_pallas(x, target):
    """mean((x - target)^2); the heavy HBM-streaming reduction runs in Pallas."""
    n = x.size
    if n == 0:
        return jnp.float32(0.0)

    xf = x.reshape(-1)
    tf = target.reshape(-1)

    # Lane padding only when the element count is not a multiple of 128 (rare for
    # conv activations); padded values are masked out in-kernel anyway.
    pad = (-n) % LANE
    if pad:
        xf = jnp.pad(xf, (0, pad))
        tf = jnp.pad(tf, (0, pad))
    rows = (n + pad) // LANE

    tile_rows = min(MAX_TILE_ROWS, _round_up(rows, SUBLANE))
    total_steps = -(-rows // tile_rows)
    num_splits = 2 if total_steps >= 2 else 1  # 2-TC sharding on v7x; harmless on 1-TC
    steps_per_split = -(-total_steps // num_splits)
    last_block = total_steps - 1

    x2d = xf.reshape(rows, LANE)
    t2d = tf.reshape(rows, LANE)

    def in_map(c, i):
        # Clamp so padded grid steps (odd total_steps) stay in bounds; their
        # contribution is masked to zero inside the kernel.
        return (jnp.minimum(c * steps_per_split + i, last_block), 0)

    kernel = _make_mse_sum_kernel(n, tile_rows, steps_per_split)

    partial = pl.pallas_call(
        kernel,
        out_shape=jax.ShapeDtypeStruct((num_splits * SUBLANE, LANE), jnp.float32),
        grid_spec=pltpu.PrefetchScalarGridSpec(
            num_scalar_prefetch=0,
            grid=(num_splits, steps_per_split),
            in_specs=[
                pl.BlockSpec((tile_rows, LANE), in_map),
                pl.BlockSpec((tile_rows, LANE), in_map),
            ],
            out_specs=pl.BlockSpec((SUBLANE, LANE), lambda c, i: (c, 0)),
            scratch_shapes=[pltpu.VMEM((SUBLANE, LANE), jnp.float32)],
        ),
        compiler_params=pltpu.CompilerParams(
            dimension_semantics=("parallel", "arbitrary"),
        ),
    )(x2d, t2d)

    # Tiny final cross-lane reduce + divide by the true element count in plain XLA.
    return jnp.sum(partial) / jnp.float32(n)


class ContentLoss:
    """JAX/Pallas port of the PyTorch ContentLoss module.

    Holds a fixed `target` activation tensor. Calling the instance returns the
    input unchanged and stores mean((x - target)^2) in `self.loss`, computed by
    a Pallas TPU kernel.
    """

    def __init__(self, target):
        self.target = lax.stop_gradient(jnp.asarray(target))  # mirrors .detach()
        self.loss = 0

    def __call__(self, x_input):
        x = jnp.asarray(x_input)

        if self.target.shape != x.shape:
            # Rare path (mirrors torch .expand()). The common same-shape case streams
            # both tensors straight from HBM with no extra copy.
            # TODO(synk): express general broadcasting via the target BlockSpec
            # index_map instead of materializing the broadcast.
            target = jnp.broadcast_to(self.target, x.shape)
        else:
            target = self.target

        self.loss = _mse_loss_pallas(x, target)
        return x_input


if __name__ == "__main__":
    key = jax.random.PRNGKey(0)
    k1, k2 = jax.random.split(key)

    # Small NCHW activations: batch=2, channels=4, spatial=16x16.
    x = jax.random.normal(k1, (2, 4, 16, 16), dtype=jnp.float32)
    target = jax.random.normal(k2, (2, 4, 16, 16), dtype=jnp.float32)

    content_loss = ContentLoss(target)
    out = content_loss(x)

    out = jax.block_until_ready(out)
    loss = jax.block_until_ready(content_loss.loss)

    # Correctness check against plain-JAX reference.
    ref = jnp.mean((x - target) ** 2)
    assert jnp.allclose(loss, ref, rtol=1e-5, atol=1e-6), (loss, ref)
    # Forward returns the input unchanged.
    assert jnp.array_equal(out, x)

    print("KERNEL_OK")
</pallas_src>

<mosaic_0001>
module attributes {stable_mosaic.version = 11 : i64} {
  func.func @kernel(%arg0: i32, %arg1: i32, %arg2: memref<16x128xf32, #tpu.memory_space<vmem>>, %arg3: memref<16x128xf32, #tpu.memory_space<vmem>>, %arg4: memref<8x128xf32, #tpu.memory_space<vmem>>, %arg5: memref<8x128xf32, #tpu.memory_space<vmem>>) attributes {dimension_semantics = [#tpu.dimension_semantics<parallel>, #tpu.dimension_semantics<arbitrary>], iteration_bounds = array<i64: 1, 1>, scalar_prefetch = 0 : i64, scratch_operands = 1 : i64, tpu.core_type = #tpu.core_type<tc>, window_params = [{transform_indices = @transform_0, window_bounds = array<i64: 16, 128>}, {transform_indices = @transform_1, window_bounds = array<i64: 16, 128>}, {transform_indices = @transform_2, window_bounds = array<i64: 8, 128>}]} {
    %c0_i32 = arith.constant 0 : i32
    %0 = arith.cmpi eq, %arg1, %c0_i32 : i32
    %1 = arith.extui %0 : i1 to i32
    %c0_i32_0 = arith.constant 0 : i32
    %2 = arith.cmpi ne, %1, %c0_i32_0 : i32
    scf.if %2 {
      %cst = arith.constant 0.000000e+00 : f32
      %20 = vector.broadcast %cst : f32 to vector<8x128xf32>
      %c0_10 = arith.constant 0 : index
      %c0_11 = arith.constant 0 : index
      %21 = vector.load %arg5[%c0_10, %c0_11] : memref<8x128xf32, #tpu.memory_space<vmem>>, vector<8x128xf32>
      tpu.vector_store %arg5[%c0_10, %c0_11], %20 {strides = array<i32>} : memref<8x128xf32, #tpu.memory_space<vmem>>, vector<8x128xf32>,
    } else {
    }
    %c0 = arith.constant 0 : index
    %c0_1 = arith.constant 0 : index
    %3 = vector.load %arg2[%c0, %c0_1] : memref<16x128xf32, #tpu.memory_space<vmem>>, vector<16x128xf32>
    %c0_2 = arith.constant 0 : index
    %c0_3 = arith.constant 0 : index
    %4 = vector.load %arg3[%c0_2, %c0_3] : memref<16x128xf32, #tpu.memory_space<vmem>>, vector<16x128xf32>
    %5 = arith.subf %3, %4 : vector<16x128xf32>
    %6 = arith.mulf %5, %5 : vector<16x128xf32>
    %c1_i32 = arith.constant 1 : i32
    %7 = arith.muli %arg0, %c1_i32 : i32
    %8 = arith.addi %7, %arg1 : i32
    %c2048_i32 = arith.constant 2048 : i32
    %9 = arith.muli %8, %c2048_i32 : i32
    %c2048_i32_4 = arith.constant 2048 : i32
    %10 = arith.addi %9, %c2048_i32_4 : i32
    %c2048_i32_5 = arith.constant 2048 : i32
    %11 = arith.cmpi sle, %10, %c2048_i32_5 : i32
    %12 = arith.extui %11 : i1 to i32
    %c0_i32_6 = arith.constant 0 : i32
    %13 = arith.cmpi ne, %12, %c0_i32_6 : i32
    scf.if %13 {
      %c0_10 = arith.constant 0 : index
      %c0_11 = arith.constant 0 : index
      %20 = vector.load %arg5[%c0_10, %c0_11] : memref<8x128xf32, #tpu.memory_space<vmem>>, vector<8x128xf32>
      %21 = vector.shape_cast %6 : vector<16x128xf32> to vector<2x8x128xf32>
      %cst = arith.constant dense<0.000000e+00> : vector<8x128xf32>
      %22 = vector.multi_reduction <add>, %21, %cst [0] : vector<2x8x128xf32> to vector<8x128xf32>
      %23 = arith.addf %20, %22 : vector<8x128xf32>
      %c0_12 = arith.constant 0 : index
      %c0_13 = arith.constant 0 : index
      %24 = vector.load %arg5[%c0_12, %c0_13] : memref<8x128xf32, #tpu.memory_space<vmem>>, vector<8x128xf32>
      tpu.vector_store %arg5[%c0_12, %c0_13], %23 {strides = array<i32>} : memref<8x128xf32, #tpu.memory_space<vmem>>, vector<8x128xf32>,
    } else {
    }
    %true = arith.constant true
    %14 = arith.xori %11, %true : i1
    %15 = arith.extui %14 : i1 to i32
    %c0_i32_7 = arith.constant 0 : i32
    %16 = arith.cmpi ne, %15, %c0_i32_7 : i32
    scf.if %16 {
      %20 = tpu.iota {dimensions = array<i32: 0>} : vector<16x128xi32>
      %21 = tpu.iota {dimensions = array<i32: 1>} : vector<16x128xi32>
      %c128_i32 = arith.constant 128 : i32
      %22 = vector.broadcast %c128_i32 : i32 to vector<16x128xi32>
      %23 = arith.muli %20, %22 : vector<16x128xi32>
      %24 = vector.broadcast %9 : i32 to vector<16x128xi32>
      %25 = arith.addi %24, %23 : vector<16x128xi32>
      %26 = arith.addi %25, %21 : vector<16x128xi32>
      %c2048_i32_10 = arith.constant 2048 : i32
      %27 = vector.broadcast %c2048_i32_10 : i32 to vector<16x128xi32>
      %28 = arith.cmpi slt, %26, %27 : vector<16x128xi32>
      %cst = arith.constant 0.000000e+00 : f32
      %29 = vector.broadcast %cst : f32 to vector<16x128xf32>
      %30 = arith.select %28, %6, %29 : vector<16x128xi1>, vector<16x128xf32>
      %c0_11 = arith.constant 0 : index
      %c0_12 = arith.constant 0 : index
      %31 = vector.load %arg5[%c0_11, %c0_12] : memref<8x128xf32, #tpu.memory_space<vmem>>, vector<8x128xf32>
      %32 = vector.shape_cast %30 : vector<16x128xf32> to vector<2x8x128xf32>
      %cst_13 = arith.constant dense<0.000000e+00> : vector<8x128xf32>
      %33 = vector.multi_reduction <add>, %32, %cst_13 [0] : vector<2x8x128xf32> to vector<8x128xf32>
      %34 = arith.addf %31, %33 : vector<8x128xf32>
      %c0_14 = arith.constant 0 : index
      %c0_15 = arith.constant 0 : index
      %35 = vector.load %arg5[%c0_14, %c0_15] : memref<8x128xf32, #tpu.memory_space<vmem>>, vector<8x128xf32>
      tpu.vector_store %arg5[%c0_14, %c0_15], %34 {strides = array<i32>} : memref<8x128xf32, #tpu.memory_space<vmem>>, vector<8x128xf32>,
    } else {
    }
    %c0_i32_8 = arith.constant 0 : i32
    %17 = arith.cmpi eq, %arg1, %c0_i32_8 : i32
    %18 = arith.extui %17 : i1 to i32
    %c0_i32_9 = arith.constant 0 : i32
    %19 = arith.cmpi ne, %18, %c0_i32_9 : i32
    scf.if %19 {
      %c0_10 = arith.constant 0 : index
      %c0_11 = arith.constant 0 : index
      %20 = vector.load %arg5[%c0_10, %c0_11] : memref<8x128xf32, #tpu.memory_space<vmem>>, vector<8x128xf32>
      %c0_12 = arith.constant 0 : index
      %c0_13 = arith.constant 0 : index
      %21 = vector.load %arg4[%c0_12, %c0_13] : memref<8x128xf32, #tpu.memory_space<vmem>>, vector<8x128xf32>
      tpu.vector_store %arg4[%c0_12, %c0_13], %20 {strides = array<i32>} : memref<8x128xf32, #tpu.memory_space<vmem>>, vector<8x128xf32>,
    } else {
    }
    return
  }
  func.func @transform_0(%arg0: i32, %arg1: i32) -> (i32, i32) {
    %c1_i32 = arith.constant 1 : i32
    %0 = arith.muli %arg0, %c1_i32 : i32
    %1 = arith.addi %0, %arg1 : i32
    %c0_i32 = arith.constant 0 : i32
    %2 = arith.minsi %1, %c0_i32 : i32
    %c0_i32_0 = arith.constant 0 : i32
    %c0_i32_1 = arith.constant 0 : i32
    return %2, %c0_i32_0 : i32, i32
  }
  func.func @transform_1(%arg0: i32, %arg1: i32) -> (i32, i32) {
    %c1_i32 = arith.constant 1 : i32
    %0 = arith.muli %arg0, %c1_i32 : i32
    %1 = arith.addi %0, %arg1 : i32
    %c0_i32 = arith.constant 0 : i32
    %2 = arith.minsi %1, %c0_i32 : i32
    %c0_i32_0 = arith.constant 0 : i32
    %c0_i32_1 = arith.constant 0 : i32
    return %2, %c0_i32_0 : i32, i32
  }
  func.func @transform_2(%arg0: i32, %arg1: i32) -> (i32, i32) {
    %c0_i32 = arith.constant 0 : i32
    %c0_i32_0 = arith.constant 0 : i32
    return %arg0, %c0_i32 : i32, i32
  }
}

</mosaic_0001>

<llo_original>
// kernel: tpu_custom_call.1
$region0: #{tpu_custom_call.1}
  #allocation0 [shape = 'u32[]', space=smem, size = 0x4, offset = 0x4, fixed_abs, tag = 'smem constant byte address 0x4 - core index']
  #allocation1 [shape = 'u32[144,128]{1,0:T(1,128)}', space=vmem, size = 0x12000, scoped, tag = 'internal scratch']
  #allocation2 [shape = 'f32[8,128]{1,0:T(8,128)}', space=vmem, size = 0x1000, scoped, tag = 'scratch operand']
  %s0 = inlined_call_operand.hbm [shape: f32[16,128], index: 0, kind: input, shape index: {}]
  %s1 = inlined_call_operand.hbm [shape: f32[16,128], index: 1, kind: input, shape index: {}]
  %s2 = inlined_call_operand.hbm [shape: f32[8,128], index: 2, kind: output, shape index: {}]
  %s3 = sld [smem:[#allocation0]]
  $region42: #{tpu_custom_call.1} parent=0
    _
  %s5 = ssub.s32 1, %s3
  %s6 = scalar_select 0, %s5, %s3
  $region1: #{tpu_custom_call.1} parent=0
    #allocation3 [shape = 'u8[8192]{0}', space=vmem, size = 0x2000, scoped, tag = 'input window, operand 0, single buffered']
    #allocation4 [shape = 's32[1]{0}', space=sflag, size = 0x4, scoped, tag = 'scoped memory for tpu_custom_call.1']
    #allocation5 [shape = 's32[1]{0}', space=sflag, size = 0x4, scoped, tag = 'scoped memory for tpu_custom_call.1']
    #allocation6 [shape = 'u8[8192]{0}', space=vmem, size = 0x2000, scoped, tag = 'input window, operand 1, single buffered']
    #allocation7 [shape = 's32[1]{0}', space=sflag, size = 0x4, scoped, tag = 'scoped memory for tpu_custom_call.1']
    #allocation8 [shape = 'u8[4096]{0}', space=vmem, size = 0x1000, scoped, tag = 'output window, operand 0, single buffered']
    %7 = vsyncpa [#allocation4], 0
    %8 = vsyncpa [#allocation7], 0
    %9 = vsyncpa [#allocation5], 0
    // Predicated region
    $region2: #{tpu_custom_call.1} parent=1 // pred_check
      _
    $region3: #{tpu_custom_call.1} parent=1 // pred_check_branch
      %11 = sbr.rel (0) target = $region5
    $region4: #{tpu_custom_call.1} parent=1 // pred_region
      %s12 = sadd.s32 0, 0
      %p13 = scmp.lt.s32.totalorder %s12, 0
      %s14 = scalar_select %p13, %s12, 0
      %s15 = smul.u32 2, %s14
      %s17 = ssub.s32 256, 256
      %18 = vsyncadd [#allocation4], %s17
      %s19 = smul.addr %s15, 128
      %s20 = scalar_lea.hbm %s0, %s19
      %s21 = sshll.u32 [#allocation3], 4
      %s22 = int_to_ptr.vmem [resolvable:$true] %s21
      %27 = dma.hbm_to_vmem [thread:$0]  %s20, 256, %s22, [#allocation4], 128, 128, 8
    $region5: #{tpu_custom_call.1} parent=1 // pred_fallthru
      _
    // Predicated region
    $region6: #{tpu_custom_call.1} parent=1 // pred_check
      _
    $region7: #{tpu_custom_call.1} parent=1 // pred_check_branch
      %29 = sbr.rel (0) target = $region9
    $region8: #{tpu_custom_call.1} parent=1 // pred_region
      %s30 = sadd.s32 0, 0
      %p31 = scmp.lt.s32.totalorder %s30, 0
      %s32 = scalar_select %p31, %s30, 0
      %s33 = smul.u32 2, %s32
      %s35 = ssub.s32 256, 256
      %36 = vsyncadd [#allocation7], %s35
      %s37 = smul.addr %s33, 128
      %s38 = scalar_lea.hbm %s1, %s37
      %s39 = sshll.u32 [#allocation6], 4
      %s40 = int_to_ptr.vmem [resolvable:$true] %s39
      %45 = dma.hbm_to_vmem [thread:$0]  %s38, 256, %s40, [#allocation7], 128, 128, 8
    $region9: #{tpu_custom_call.1} parent=1 // pred_fallthru
      _
    // Predicated region
    $region10: #{tpu_custom_call.1} parent=1 // pred_check
      _
    $region11: #{tpu_custom_call.1} parent=1 // pred_check_branch
      %47 = sbr.rel (0) target = $region13
    $region12: #{tpu_custom_call.1} parent=1 // pred_region
      %48 = dma.done [#allocation4], 256
    $region13: #{tpu_custom_call.1} parent=1 // pred_fallthru
      _
    // Predicated region
    $region14: #{tpu_custom_call.1} parent=1 // pred_check
      _
    $region15: #{tpu_custom_call.1} parent=1 // pred_check_branch
      %50 = sbr.rel (0) target = $region17
    $region16: #{tpu_custom_call.1} parent=1 // pred_region
      %51 = dma.done [#allocation7], 256
    $region17: #{tpu_custom_call.1} parent=1 // pred_fallthru
      _
    %s52 = sadd.s32 0, 0
    %p53 = scmp.lt.s32.totalorder %s52, 0
    %s54 = scalar_select %p53, %s52, 0
    %s55 = smul.u32 2, %s54
    %s56 = sadd.s32 0, 0
    %p57 = scmp.lt.s32.totalorder %s56, 0
    %s58 = scalar_select %p57, %s56, 0
    %s59 = smul.u32 2, %s58
    %p60 = scmp.eq.s32.totalorder 0, 0
    // Predicated region
    $region18: #{tpu_custom_call.1} parent=1 // pred_check
      %p61 = pneg %p60
    $region19: #{tpu_custom_call.1} parent=1 // pred_check_branch
      %63 = sbr.rel (%p61) target = $region21
    $region20: #{tpu_custom_call.1} parent=1 // pred_region
      %64 = vst [vmem:[#allocation2] sm:$0xff] 0.0
    $region21: #{tpu_custom_call.1} parent=1 // pred_fallthru
      _
    %v65 = vld [vmem:[#allocation3] sm:$0xff]
    %v66 = vld [vmem:[#allocation3 + $0x8] sm:$0xff]
    %v67 = vld [vmem:[#allocation6] sm:$0xff]
    %v68 = vld [vmem:[#allocation6 + $0x8] sm:$0xff]
    %v69 = vsub.f32 %v65, %v67
    %v70 = vsub.f32 %v66, %v68
    %v71 = vmul.f32 %v69, %v69
    %v72 = vmul.f32 %v70, %v70
    %s73 = sadd.s32 0, 0
    %s74 = smul.u32 %s73, 2048
    %s75 = sadd.s32 %s74, 2048
    %p76 = scmp.le.s32.totalorder %s75, 2048
    // Predicated region
    $region22: #{tpu_custom_call.1} parent=1 // pred_check
      %p77 = pneg %p76
    $region23: #{tpu_custom_call.1} parent=1 // pred_check_branch
      %79 = sbr.rel (%p77) target = $region25
    $region24: #{tpu_custom_call.1} parent=1 // pred_region
      %v80 = vld [vmem:[#allocation2] sm:$0xff]
      %v81 = vadd.f32 %v71, %v72
      %v82 = vadd.f32 %v80, %v81
      %83 = vst [vmem:[#allocation2] sm:$0xff] %v82
    $region25: #{tpu_custom_call.1} parent=1 // pred_fallthru
      _
    %p84 = scmp.gt.s32.totalorder %s75, 2048
    // Predicated region
    $region26: #{tpu_custom_call.1} parent=1 // pred_check
      %p85 = pneg %p84
    $region27: #{tpu_custom_call.1} parent=1 // pred_check_branch
      %87 = sbr.rel (%p85) target = $region29
    $region28: #{tpu_custom_call.1} parent=1 // pred_region
      %v88 = vlaneseq
      %v89 = vshrl.u32 %v88, 7
      %v90 = vadd.s32 %v89, 8
      %v91 = vlaneseq
      %v92 = vand.u32 %v91, 127
      %v93 = vmul.u32 %v89, 128
      %v94 = vmul.u32 %v90, 128
      %v95 = vstv %s74
      %v96 = vadd.s32 %v95, %v93
      %v97 = vadd.s32 %v95, %v94
      %v98 = vadd.s32 %v96, %v92
      %v99 = vadd.s32 %v97, %v92
      %vm100 = vcmp.lt.s32.totalorder %v98, 2048
      %vm101 = vcmp.lt.s32.totalorder %v99, 2048
      %v102 = vsel %vm100, %v71, 0.0
      %v103 = vsel %vm101, %v72, 0.0
      %v104 = vld [vmem:[#allocation2] sm:$0xff]
      %v105 = vadd.f32 %v102, %v103
      %v106 = vadd.f32 %v104, %v105
      %107 = vst [vmem:[#allocation2] sm:$0xff] %v106
    $region29: #{tpu_custom_call.1} parent=1 // pred_fallthru
      _
    // Predicated region
    $region30: #{tpu_custom_call.1} parent=1 // pred_check
      %p108 = pneg %p60
    $region31: #{tpu_custom_call.1} parent=1 // pred_check_branch
      %110 = sbr.rel (%p108) target = $region33
    $region32: #{tpu_custom_call.1} parent=1 // pred_region
      %v111 = vld [vmem:[#allocation2] sm:$0xff]
      %112 = vst [vmem:[#allocation8] sm:$0xff] %v111
    $region33: #{tpu_custom_call.1} parent=1 // pred_fallthru
      _
    // Predicated region
    $region34: #{tpu_custom_call.1} parent=1 // pred_check
      _
    $region35: #{tpu_custom_call.1} parent=1 // pred_check_branch
      %114 = sbr.rel (0) target = $region37
    $region36: #{tpu_custom_call.1} parent=1 // pred_region
      %s116 = ssub.s32 128, 128
      %117 = vsyncadd [#allocation5], %s116
      %s119 = sshll.u32 [#allocation8], 4
      %s120 = int_to_ptr.vmem [resolvable:$true] %s119
      %122 = dma.vmem_to_hbm [thread:$0]  %s120, 128, %s2, [#allocation5]
    $region37: #{tpu_custom_call.1} parent=1 // pred_fallthru
      _
    // Predicated region
    $region38: #{tpu_custom_call.1} parent=1 // pred_check
      _
    $region39: #{tpu_custom_call.1} parent=1 // pred_check_branch
      %124 = sbr.rel (0) target = $region41
    $region40: #{tpu_custom_call.1} parent=1 // pred_region
      %125 = dma.done [#allocation5], 128
    $region41: #{tpu_custom_call.1} parent=1 // pred_fallthru
      _
    %126 = vsyncpa [#allocation4], 1
    %127 = vsyncpa [#allocation7], 1
    %128 = vsyncpa [#allocation5], 1

</llo_original>
